<compile_context>
chip_gen: v6e
topology: v6e:2x2x1
jax: 0.10.0
libtpu: 0.0.40
codegen_flags: <defaults>
</compile_context>

<pallas_src>
import functools
import math

import jax
import jax.numpy as jnp
from jax.experimental import pallas as pl
from jax.experimental.pallas import tpu as pltpu

LANES = 128


def _mem_update_kernel(x_ref, o_ref, mem_ref, *, decay, init_thre, D, int_thre):
    """One (m-tile, t) grid step of the MSF membrane update + firing.

    x_ref:   (1, TM, LANES)  input x[t] for this m-tile
    o_ref:   (1, TM, LANES)  output spike[t] for this m-tile
    mem_ref: (TM, LANES)     membrane potential carried across t (VMEM scratch)

    Grid is (M_tiles, T); T is the innermost (fastest) axis, so mem_ref is
    re-initialized at t == 0 for every m-tile and carried across t only.
    """
    t = pl.program_id(1)
    x_t = x_ref[0]  # (TM, LANES) float32

    @pl.when(t == 0)
    def _():
        # mem = x[0]
        mem_ref[...] = x_t

    @pl.when(t > 0)
    def _():
        mem_old = mem_ref[...]
        # PyTorch: mask = spike_{t-1} > 0 ; mem = mem_old*decay*(1-mask) + x
        # spike_{t-1} > 0  <=>  mem_{t-1} >= init_thre (lowest threshold fired),
        # so the previous spike never needs to be stored.
        mem_ref[...] = jnp.where(mem_old >= init_thre, x_t, mem_old * decay + x_t)

    mem = mem_ref[...]

    # Multi-threshold firing: spike = sum_{d=0..D-1} (mem >= init_thre + d).
    if int_thre:
        # Exact closed form for integer thresholds:
        #   mem >= k  <=>  floor(mem) >= k  (k integer), and floor(mem)-init_thre
        #   is exact integer arithmetic in f32 for |mem| < 2^23.
        cnt = jnp.floor(mem) - (init_thre - 1.0)
    else:
        # General closed form; can differ by 1 from the per-threshold compares
        # only when (mem - init_thre) rounds exactly onto an integer boundary.
        cnt = jnp.floor(mem - init_thre) + 1.0
    spike = jnp.clip(cnt, 0.0, float(D))

    o_ref[0] = spike.astype(o_ref.dtype)


def mem_update_msf(x, decay=0.25, init_thre=1.0, D=8,
                   tm_rows=1024, out_dtype=jnp.float32):
    """x: array of shape (T, B, C, H, W). Returns spikes, same shape.

    tm_rows: target rows (of 128 lanes) per m-tile; 1024 rows = 512 KiB/buffer,
             small enough for v7x's 64 MiB VMEM / default scoped limits while
             amortizing per-grid-step overhead.
    out_dtype: spike values are exact integers in [0, D]; use jnp.bfloat16 to
             halve output HBM traffic on bandwidth-bound parts (v5e/v6e).
    """
    x = x.astype(jnp.float32)
    T = x.shape[0]
    step_shape = x.shape[1:]
    n = math.prod(step_shape)

    # Row count of the lane-dense (rows, 128) slab for one time step.
    m0 = pl.cdiv(n, LANES)
    if m0 <= tm_rows:
        tm = m0                      # single m-tile; block == full dim, any size ok
        m_total = m0
    else:
        tm = tm_rows                 # multiple of 8 (sublane) by construction
        m_total = pl.cdiv(m0, tm) * tm
    n_padded = m_total * LANES

    x_flat = x.reshape(T, n)
    if n_padded != n:
        # Padded tail is zeros -> spikes 0 there (for init_thre > 0); sliced off
        # below either way.  Aligned inputs skip this copy entirely.
        x_flat = jnp.pad(x_flat, ((0, 0), (0, n_padded - n)))
    x3 = x_flat.reshape(T, m_total, LANES)

    num_m_tiles = m_total // tm
    int_thre = float(init_thre).is_integer()

    kernel = functools.partial(
        _mem_update_kernel,
        decay=float(decay), init_thre=float(init_thre), D=int(D),
        int_thre=int_thre,
    )

    out3 = pl.pallas_call(
        kernel,
        out_shape=jax.ShapeDtypeStruct((T, m_total, LANES), out_dtype),
        grid_spec=pltpu.PrefetchScalarGridSpec(
            num_scalar_prefetch=0,
            # M-tile axis outer (parallel across cores), T innermost (recurrence).
            grid=(num_m_tiles, T),
            in_specs=[pl.BlockSpec((1, tm, LANES), lambda m, t: (t, m, 0))],
            out_specs=pl.BlockSpec((1, tm, LANES), lambda m, t: (t, m, 0)),
            scratch_shapes=[
                pltpu.VMEM((tm, LANES), jnp.float32),  # membrane potential carry
            ],
        ),
        compiler_params=pltpu.CompilerParams(
            # m-tiles are independent -> "parallel" (v7x megacore sharding);
            # time recurrence must run sequentially -> "arbitrary".
            dimension_semantics=("parallel", "arbitrary"),
        ),
    )(x3)

    out = out3.reshape(T, n_padded)[:, :n].reshape((T,) + step_shape)
    return out


def mem_update_msf_ref(x, decay=0.25, init_thre=1.0, D=8):
    """Pure-JAX reference mirroring the PyTorch forward exactly."""
    x = x.astype(jnp.float32)
    T = x.shape[0]
    outs = []
    mem_old = jnp.zeros_like(x[0])
    spike = jnp.zeros_like(x[0])
    for i in range(T):
        if i >= 1:
            mask = (spike > 0).astype(jnp.float32)
            mem = mem_old * decay * (1.0 - mask) + x[i]
        else:
            mem = x[i]
        spike = jnp.zeros_like(mem)
        for d in range(D):
            spike = spike + (mem >= (init_thre + float(d))).astype(jnp.float32)
        mem_old = mem
        outs.append(spike)
    return jnp.stack(outs, axis=0)


if __name__ == "__main__":
    key = jax.random.PRNGKey(0)

    # Case 1: lane-aligned, single m-tile (module-default small shapes).
    T, B, C, H, W = 8, 2, 4, 16, 16
    k1, k2 = jax.random.split(key)
    x1 = jax.random.normal(k1, (T, B, C, H, W), dtype=jnp.float32) * 3.0
    out1 = jax.block_until_ready(mem_update_msf(x1))
    ref1 = mem_update_msf_ref(x1)
    assert out1.shape == (T, B, C, H, W)
    assert jnp.allclose(out1, ref1), "mismatch vs reference (case 1)"

    # Case 2: ragged per-step size (needs padding) + forced multi-tile grid
    # (tm_rows=64) to exercise the tiled (M_tiles, T) path.
    T2, B2, C2, H2, W2 = 4, 2, 8, 10, 10   # n = 1600, not a multiple of 128
    x2 = jax.random.normal(k2, (T2, B2, C2, H2, W2), dtype=jnp.float32) * 3.0
    out2 = jax.block_until_ready(mem_update_msf(x2, tm_rows=8))
    ref2 = mem_update_msf_ref(x2)
    assert out2.shape == (T2, B2, C2, H2, W2)
    assert jnp.allclose(out2, ref2), "mismatch vs reference (case 2)"

    print("KERNEL_OK")
</pallas_src>

<mosaic_0001>
module attributes {stable_mosaic.version = 11 : i64} {
  func.func @_mem_update_kernel(%arg0: i32, %arg1: i32, %arg2: memref<1x16x128xf32, #tpu.memory_space<vmem>>, %arg3: memref<1x16x128xf32, #tpu.memory_space<vmem>>, %arg4: memref<16x128xf32, #tpu.memory_space<vmem>>) attributes {dimension_semantics = [#tpu.dimension_semantics<parallel>, #tpu.dimension_semantics<arbitrary>], iteration_bounds = array<i64: 1, 8>, scalar_prefetch = 0 : i64, scratch_operands = 1 : i64, tpu.core_type = #tpu.core_type<tc>, window_params = [{transform_indices = @transform_0, window_bounds = array<i64: 1, 16, 128>}, {transform_indices = @transform_1, window_bounds = array<i64: 1, 16, 128>}]} {
    %c0 = arith.constant 0 : index
    %c0_0 = arith.constant 0 : index
    %c0_1 = arith.constant 0 : index
    %0 = vector.load %arg2[%c0, %c0_0, %c0_1] : memref<1x16x128xf32, #tpu.memory_space<vmem>>, vector<1x16x128xf32>
    %1 = vector.shape_cast %0 : vector<1x16x128xf32> to vector<16x128xf32>
    %c0_i32 = arith.constant 0 : i32
    %2 = arith.cmpi eq, %arg1, %c0_i32 : i32
    %3 = arith.extui %2 : i1 to i32
    %c0_i32_2 = arith.constant 0 : i32
    %4 = arith.cmpi ne, %3, %c0_i32_2 : i32
    scf.if %4 {
      %c0_12 = arith.constant 0 : index
      %c0_13 = arith.constant 0 : index
      %19 = vector.load %arg4[%c0_12, %c0_13] : memref<16x128xf32, #tpu.memory_space<vmem>>, vector<16x128xf32>
      tpu.vector_store %arg4[%c0_12, %c0_13], %1 {strides = array<i32>} : memref<16x128xf32, #tpu.memory_space<vmem>>, vector<16x128xf32>,
    } else {
    }
    %c0_i32_3 = arith.constant 0 : i32
    %5 = arith.cmpi sgt, %arg1, %c0_i32_3 : i32
    %6 = arith.extui %5 : i1 to i32
    %c0_i32_4 = arith.constant 0 : i32
    %7 = arith.cmpi ne, %6, %c0_i32_4 : i32
    scf.if %7 {
      %c0_12 = arith.constant 0 : index
      %c0_13 = arith.constant 0 : index
      %19 = vector.load %arg4[%c0_12, %c0_13] : memref<16x128xf32, #tpu.memory_space<vmem>>, vector<16x128xf32>
      %cst_14 = arith.constant 1.000000e+00 : f32
      %20 = vector.broadcast %cst_14 : f32 to vector<16x128xf32>
      %21 = arith.cmpf oge, %19, %20 : vector<16x128xf32>
      %cst_15 = arith.constant 2.500000e-01 : f32
      %22 = vector.broadcast %cst_15 : f32 to vector<16x128xf32>
      %23 = arith.mulf %19, %22 : vector<16x128xf32>
      %24 = arith.addf %23, %1 : vector<16x128xf32>
      %25 = arith.select %21, %1, %24 : vector<16x128xi1>, vector<16x128xf32>
      %c0_16 = arith.constant 0 : index
      %c0_17 = arith.constant 0 : index
      %26 = vector.load %arg4[%c0_16, %c0_17] : memref<16x128xf32, #tpu.memory_space<vmem>>, vector<16x128xf32>
      tpu.vector_store %arg4[%c0_16, %c0_17], %25 {strides = array<i32>} : memref<16x128xf32, #tpu.memory_space<vmem>>, vector<16x128xf32>,
    } else {
    }
    %c0_5 = arith.constant 0 : index
    %c0_6 = arith.constant 0 : index
    %8 = vector.load %arg4[%c0_5, %c0_6] : memref<16x128xf32, #tpu.memory_space<vmem>>, vector<16x128xf32>
    %9 = math.floor %8 : vector<16x128xf32>
    %cst = arith.constant 0.000000e+00 : f32
    %10 = vector.broadcast %cst : f32 to vector<16x128xf32>
    %11 = arith.subf %9, %10 : vector<16x128xf32>
    %cst_7 = arith.constant 0.000000e+00 : f32
    %cst_8 = arith.constant 8.000000e+00 : f32
    %12 = vector.broadcast %cst_7 : f32 to vector<16x128xf32>
    %13 = arith.maximumf %12, %11 : vector<16x128xf32>
    %14 = vector.broadcast %cst_8 : f32 to vector<16x128xf32>
    %15 = arith.minimumf %14, %13 : vector<16x128xf32>
    %c0_9 = arith.constant 0 : index
    %c0_10 = arith.constant 0 : index
    %c0_11 = arith.constant 0 : index
    %16 = vector.load %arg3[%c0_9, %c0_10, %c0_11] : memref<1x16x128xf32, #tpu.memory_space<vmem>>, vector<1x16x128xf32>
    %17 = vector.shape_cast %16 : vector<1x16x128xf32> to vector<16x128xf32>
    %18 = vector.shape_cast %15 : vector<16x128xf32> to vector<1x16x128xf32>
    tpu.vector_store %arg3[%c0_9, %c0_10, %c0_11], %18 {strides = array<i32>} : memref<1x16x128xf32, #tpu.memory_space<vmem>>, vector<1x16x128xf32>,
    return
  }
  func.func @transform_0(%arg0: i32, %arg1: i32) -> (i32, i32, i32) {
    %c0_i32 = arith.constant 0 : i32
    %c0_i32_0 = arith.constant 0 : i32
    return %arg1, %arg0, %c0_i32 : i32, i32, i32
  }
  func.func @transform_1(%arg0: i32, %arg1: i32) -> (i32, i32, i32) {
    %c0_i32 = arith.constant 0 : i32
    %c0_i32_0 = arith.constant 0 : i32
    return %arg1, %arg0, %c0_i32 : i32, i32, i32
  }
}

</mosaic_0001>

<llo_original>
// kernel: tpu_custom_call.1
$region0: #{tpu_custom_call.1}
  #allocation0 [shape = 'u32[]', space=smem, size = 0x4, offset = 0x4, fixed_abs, tag = 'smem constant byte address 0x4 - core index']
  #allocation1 [shape = 'u32[144,128]{1,0:T(1,128)}', space=vmem, size = 0x12000, scoped, tag = 'internal scratch']
  #allocation2 [shape = 'f32[16,128]{1,0:T(8,128)}', space=vmem, size = 0x2000, scoped, tag = 'scratch operand']
  %s0 = inlined_call_operand.hbm [shape: f32[8,16,128], index: 0, kind: input, shape index: {}]
  %s1 = inlined_call_operand.hbm [shape: f32[8,16,128], index: 1, kind: output, shape index: {}]
  %s2 = sld [smem:[#allocation0]]
  $region49: #{tpu_custom_call.1} parent=0
    _
  %s4 = ssub.s32 1, %s2
  %s5 = scalar_select 0, %s4, %s2
  $region1: #{tpu_custom_call.1} parent=0
    #allocation3 [shape = 'u8[16384]{0}', space=vmem, size = 0x4000, scoped, tag = 'input window, operand 0']
    #allocation4 [shape = 's32[2]{0}', space=sflag, size = 0x8, scoped, tag = 'scoped memory for tpu_custom_call.1']
    #allocation5 [shape = 's32[2]{0}', space=sflag, size = 0x8, scoped, tag = 'scoped memory for tpu_custom_call.1']
    #allocation6 [shape = 'u8[16384]{0}', space=vmem, size = 0x4000, scoped, tag = 'output window, operand 0']
    %6 = vsyncpa [#allocation4], 0
    %s7 = scalar_lea.sflag [#allocation4], 1
    %8 = vsyncpa %s7, 0
    %9 = vsyncpa [#allocation5], 0
    %s10 = scalar_lea.sflag [#allocation5], 1
    %11 = vsyncpa %s10, 0
    loop: start=0, step=1, limit=10
    $region2: #{tpu_custom_call.1} parent=1 // loop_pre_header
      _
    $region3: #{tpu_custom_call.1} parent=1 // loop_header
      %s13 = sphi 0, %s17
      %p14 = scmp.ge.s32.totalorder %s13, 10
      %s20 = sphi 0, %s32
      %s21 = sphi 0, %s28
      %s22 = sphi 0, %s20
      %s23 = sphi 0, %s21
      %s24 = sphi 0, %s22
      %s25 = sphi 0, %s23
      %s37 = sphi 0, %s39
      %s40 = sphi 0, %s37
      %s41 = sphi 0, %s40
      %s57 = sphi 0, %s41
      %s65 = sphi 0, %s67
      %s68 = sphi 0, %s65
      %s69 = sphi 0, %s68
      %s85 = sphi 0, %s69
    $region4: #{tpu_custom_call.1} parent=1 // loop_header_branch
      %16 = sbr.rel (%p14) target = $region8
    $region5: #{tpu_custom_call.1} parent=1 // loop_body
      %s18 = ssub.s32 %s13, 1
      %s19 = ssub.s32 %s13, 2
      %s26 = sadd.s32 1, %s21
      %p27 = scmp.ge.s32.totalorder %s26, 8
      %s28 = scalar_select %p27, 0, %s26
      %s29 = sadd.s32 1, %s20
      %s30 = scalar_select %p27, %s29, %s20
      %p31 = scmp.ge.s32.totalorder %s30, 1
      %s32 = scalar_select %p31, 0, %s30
      %s33 = ssub.s32 %s21, %s28
      %s34 = ssub.s32 %s20, %s32
      %s35 = sor.u32 %s33, %s34
      %p36 = scmp.eq.s32.totalorder %s35, 0
      %s38 = sadd.s32 %s37, 1
      %s39 = scalar_select %p36, %s37, %s38
      %p42 = pneg %p36
      %p43 = scmp.eq.s32.totalorder %s13, 7
      %p44 = por %p42, %p43
      %p45 = scmp.ne.s32.totalorder %s37, %s40
      %p46 = scmp.eq.s32.totalorder %s13, 0
      %p47 = por %p45, %p46
      %p48 = scmp.ne.s32.totalorder %s37, %s40
      %p49 = scmp.eq.s32.totalorder %s18, 7
      %p50 = por %p48, %p49
      %p51 = scmp.ne.s32.totalorder %s40, %s41
      %p52 = scmp.eq.s32.totalorder %s18, 0
      %p53 = por %p51, %p52
      %p54 = scmp.ne.s32.totalorder %s40, %s41
      %p55 = scmp.eq.s32.totalorder %s19, 7
      %p56 = por %p54, %p55
      %p58 = scmp.ne.s32.totalorder %s41, %s57
      %p59 = scmp.eq.s32.totalorder %s19, 0
      %p60 = por %p58, %p59
      %s61 = ssub.s32 %s21, %s28
      %s62 = ssub.s32 %s20, %s32
      %s63 = sor.u32 %s61, %s62
      %p64 = scmp.eq.s32.totalorder %s63, 0
      %s66 = sadd.s32 %s65, 1
      %s67 = scalar_select %p64, %s65, %s66
      %p70 = pneg %p64
      %p71 = scmp.eq.s32.totalorder %s13, 7
      %p72 = por %p70, %p71
      %p73 = scmp.ne.s32.totalorder %s65, %s68
      %p74 = scmp.eq.s32.totalorder %s13, 0
      %p75 = por %p73, %p74
      %p76 = scmp.ne.s32.totalorder %s65, %s68
      %p77 = scmp.eq.s32.totalorder %s18, 7
      %p78 = por %p76, %p77
      %p79 = scmp.ne.s32.totalorder %s68, %s69
      %p80 = scmp.eq.s32.totalorder %s18, 0
      %p81 = por %p79, %p80
      %p82 = scmp.ne.s32.totalorder %s68, %s69
      %p83 = scmp.eq.s32.totalorder %s19, 7
      %p84 = por %p82, %p83
      %p86 = scmp.ne.s32.totalorder %s69, %s85
      %p87 = scmp.eq.s32.totalorder %s19, 0
      %p88 = por %p86, %p87
      %p89 = scmp.le.s32.totalorder 1, %s13
      %p90 = scmp.lt.s32.totalorder %s13, 9
      %p91 = pnand %p89, %p90
      %p92 = pneg %p91
      // Predicated region
      $region9: #{tpu_custom_call.1} parent=5 // pred_check
        _
      $region10: #{tpu_custom_call.1} parent=5 // pred_check_branch
        %94 = sbr.rel (%p91) target = $region12
      $region11: #{tpu_custom_call.1} parent=5 // pred_region
        %s95 = ssub.s32 %s13, 1
      $region12: #{tpu_custom_call.1} parent=5 // pred_fallthru
        _
      %p96 = scmp.lt.s32.totalorder %s13, 8
      // Predicated region
      $region13: #{tpu_custom_call.1} parent=5 // pred_check
        %p97 = pneg %p96
      $region14: #{tpu_custom_call.1} parent=5 // pred_check_branch
        %99 = sbr.rel (%p97) target = $region16
      $region15: #{tpu_custom_call.1} parent=5 // pred_region
        // Predicated region
        $region17: #{tpu_custom_call.1} parent=15 // pred_check
          %p100 = pneg %p47
        $region18: #{tpu_custom_call.1} parent=15 // pred_check_branch
          %102 = sbr.rel (%p100) target = $region20
        $region19: #{tpu_custom_call.1} parent=15 // pred_region
          %s103 = sand.u32 %s37, 1
          %s104 = scalar_lea.sflag [#allocation4], %s103
          %s105 = sand.u32 %s37, 1
          %s106 = smul.addr %s105, 16
          %s107 = scalar_lea.vmem [#allocation3], %s106
          %s108 = smul.u32 2, %s20
          %s110 = ssub.s32 256, 256
          %111 = vsyncadd %s104, %s110
          %s112 = smul.addr %s21, 2
          %s113 = sadd.s32 %s108, %s112
          %s114 = smul.addr %s113, 128
          %s115 = scalar_lea.hbm %s0, %s114
          %s116 = sshll.u32 %s107, 4
          %s117 = int_to_ptr.vmem [resolvable:$true] %s116
          %122 = dma.hbm_to_vmem [thread:$0]  %s115, 256, %s117, %s104, 128, 128, 8
        $region20: #{tpu_custom_call.1} parent=15 // pred_fallthru
          _
      $region16: #{tpu_custom_call.1} parent=5 // pred_fallthru
        _
      %p123 = scmp.le.s32.totalorder 1, %s13
      %p124 = scmp.lt.s32.totalorder %s13, 9
      %p125 = pnand %p123, %p124
      %p126 = pneg %p125
      // Predicated region
      $region21: #{tpu_custom_call.1} parent=5 // pred_check
        _
      $region22: #{tpu_custom_call.1} parent=5 // pred_check_branch
        %128 = sbr.rel (%p125) target = $region24
      $region23: #{tpu_custom_call.1} parent=5 // pred_region
        %s129 = ssub.s32 %s13, 1
        %s130 = sand.u32 %s40, 1
        %s131 = scalar_lea.sflag [#allocation4], %s130
        %s132 = sand.u32 %s40, 1
        %s133 = smul.addr %s132, 16
        %s134 = scalar_lea.vmem [#allocation3], %s133
        // Predicated region
        $region25: #{tpu_custom_call.1} parent=23 // pred_check
          %p135 = pneg %p53
        $region26: #{tpu_custom_call.1} parent=23 // pred_check_branch
          %137 = sbr.rel (%p135) target = $region28
        $region27: #{tpu_custom_call.1} parent=23 // pred_region
          %138 = dma.done %s131, 256
        $region28: #{tpu_custom_call.1} parent=23 // pred_fallthru
          _
        %s139 = sand.u32 %s40, 1
        %s140 = scalar_lea.sflag [#allocation4], %s139
        %s141 = sand.u32 %s40, 1
        %s142 = smul.addr %s141, 16
        %s143 = scalar_lea.vmem [#allocation3], %s142
        %p144 = pneg %p53
        %p145 = pneg %p50
        %p146 = pneg %p81
        %p147 = pneg %p78
        %s148 = sand.u32 %s68, 1
        %s149 = scalar_lea.sflag [#allocation5], %s148
        %s150 = sand.u32 %s68, 1
        %s151 = smul.addr %s150, 16
        %s152 = scalar_lea.vmem [#allocation6], %s151
        %s153 = smul.u32 2, %s22
        %s154 = smul.u32 2, %s22
        %v155 = vld [vmem:[%s134] sm:$0xff]
        %v156 = vld [vmem:[%s134 + $0x8] sm:$0xff]
        %p157 = scmp.eq.s32.totalorder %s23, 0
        // Predicated region
        $region29: #{tpu_custom_call.1} parent=23 // pred_check
          %p158 = pneg %p157
        $region30: #{tpu_custom_call.1} parent=23 // pred_check_branch
          %160 = sbr.rel (%p158) target = $region32
        $region31: #{tpu_custom_call.1} parent=23 // pred_region
          %161 = vst [vmem:[#allocation2] sm:$0xff] %v155
          %162 = vst [vmem:[#allocation2 + $0x8] sm:$0xff] %v156
        $region32: #{tpu_custom_call.1} parent=23 // pred_fallthru
          _
        %p163 = scmp.gt.s32.totalorder %s23, 0
        // Predicated region
        $region33: #{tpu_custom_call.1} parent=23 // pred_check
          %p164 = pneg %p163
        $region34: #{tpu_custom_call.1} parent=23 // pred_check_branch
          %166 = sbr.rel (%p164) target = $region36
        $region35: #{tpu_custom_call.1} parent=23 // pred_region
          %v167 = vld [vmem:[#allocation2] sm:$0xff]
          %v168 = vld [vmem:[#allocation2 + $0x8] sm:$0xff]
          %vm169 = vcmp.ge.f32.partialorder %v167, 1.0
          %vm170 = vcmp.ge.f32.partialorder %v168, 1.0
          %v171 = vmul.f32 %v167, 0.25
          %v172 = vmul.f32 %v168, 0.25
          %v173 = vadd.f32 %v171, %v155
          %v174 = vadd.f32 %v172, %v156
          %v175 = vsel %vm169, %v155, %v173
          %v176 = vsel %vm170, %v156, %v174
          %177 = vst [vmem:[#allocation2] sm:$0xff] %v175
          %178 = vst [vmem:[#allocation2 + $0x8] sm:$0xff] %v176
        $region36: #{tpu_custom_call.1} parent=23 // pred_fallthru
          _
        %v179 = vld [vmem:[#allocation2] sm:$0xff]
        %v180 = vld [vmem:[#allocation2 + $0x8] sm:$0xff]
        %v181 = vfloor.f32 %v179
        %v182 = vfloor.f32 %v180
        %v183 = vmax.f32 %v181, 0.0
        %v184 = vmax.f32 %v182, 0.0
        %v185 = vmin.f32 %v183, 8.0
        %v186 = vmin.f32 %v184, 8.0
        %187 = vst [vmem:[%s152] sm:$0xff] %v185
        %188 = vst [vmem:[%s152 + $0x8] sm:$0xff] %v186
        %s189 = sand.u32 %s68, 1
        %s190 = scalar_lea.sflag [#allocation5], %s189
        %s191 = sand.u32 %s68, 1
        %s192 = smul.addr %s191, 16
        %s193 = scalar_lea.vmem [#allocation6], %s192
        // Predicated region
        $region37: #{tpu_custom_call.1} parent=23 // pred_check
          %p194 = pneg %p78
        $region38: #{tpu_custom_call.1} parent=23 // pred_check_branch
          %196 = sbr.rel (%p194) target = $region40
        $region39: #{tpu_custom_call.1} parent=23 // pred_region
          %s197 = smul.u32 2, %s22
          %s199 = ssub.s32 256, 256
          %200 = vsyncadd %s190, %s199
          %s201 = smul.addr %s23, 2
          %s202 = sadd.s32 %s197, %s201
          %s203 = smul.addr %s202, 128
          %s204 = scalar_lea.hbm %s1, %s203
          %s205 = sshll.u32 %s193, 4
          %s206 = int_to_ptr.vmem [resolvable:$true] %s205
          %211 = dma.vmem_to_hbm [thread:$0]  %s206, 256, %s204, %s190, 128, 128, 8
        $region40: #{tpu_custom_call.1} parent=23 // pred_fallthru
          _
      $region24: #{tpu_custom_call.1} parent=5 // pred_fallthru
        _
      %p212 = scmp.le.s32.totalorder 2, %s13
      // Predicated region
      $region41: #{tpu_custom_call.1} parent=5 // pred_check
        %p213 = pneg %p212
      $region42: #{tpu_custom_call.1} parent=5 // pred_check_branch
        %215 = sbr.rel (%p213) target = $region44
      $region43: #{tpu_custom_call.1} parent=5 // pred_region
        %s216 = ssub.s32 %s13, 2
        // Predicated region
        $region45: #{tpu_custom_call.1} parent=43 // pred_check
          %p217 = pneg %p84
        $region46: #{tpu_custom_call.1} parent=43 // pred_check_branch
          %219 = sbr.rel (%p217) target = $region48
        $region47: #{tpu_custom_call.1} parent=43 // pred_region
          %s220 = sand.u32 %s69, 1
          %s221 = scalar_lea.sflag [#allocation5], %s220
          %s222 = sand.u32 %s69, 1
          %s223 = smul.addr %s222, 16
          %s224 = scalar_lea.vmem [#allocation6], %s223
          %225 = dma.done %s221, 256
        $region48: #{tpu_custom_call.1} parent=43 // pred_fallthru
          _
      $region44: #{tpu_custom_call.1} parent=5 // pred_fallthru
        _
    $region6: #{tpu_custom_call.1} parent=1 // loop_footer
      %s17 = sadd.s32 1, %s13
    $region7: #{tpu_custom_call.1} parent=1 // loop_footer_branch
      %12 = sbr.rel target = $region3
    $region8: #{tpu_custom_call.1} parent=1 // loop_exit
      _
    %226 = vsyncpa [#allocation4], 1
    %s227 = scalar_lea.sflag [#allocation4], 1
    %228 = vsyncpa %s227, 1
    %229 = vsyncpa [#allocation5], 1
    %s230 = scalar_lea.sflag [#allocation5], 1
    %231 = vsyncpa %s230, 1

</llo_original>
